<compile_context>
chip_gen: v5e
topology: v5e:2x2
jax: 0.10.0
libtpu: 0.0.40
codegen_flags: <defaults>
</compile_context>

<pallas_src>
import jax
import jax.numpy as jnp
from jax.experimental import pallas as pl
from jax.experimental.pallas import tpu as pltpu


def _interaction_kernel(x_ref, wcb_ref, bc_ref, wft_ref, bf_ref, o_ref):
    # x_ref:   (TB*C, F)    batch-block of rows, row (b*C + c) = x[b, c, :]
    # wcb_ref: (TB*C, TB*C) block-diagonal kron(I_TB, Wc)
    # bc_ref:  (TB*C, 1)    channel bias as a column (per-lane broadcast)
    # wft_ref: (F, F)       Wf^T (pre-transposed in the wrapper)
    # bf_ref:  (1, F)       filter bias row
    x = x_ref[...]

    # Channel mix for the whole batch block in one MXU matmul.
    z = jnp.dot(wcb_ref[...], x, preferred_element_type=jnp.float32)
    z = z + bc_ref[...]                       # (TB*C,1) broadcasts along lanes (VPU)

    # Filter mix: (TB*C, F) @ (F, F); no in-kernel transpose.
    out = jnp.dot(z, wft_ref[...], preferred_element_type=jnp.float32)
    out = out + bf_ref[...]                   # (1, F) broadcasts along sublanes

    o_ref[...] = out.astype(o_ref.dtype)


def seperate_fc_interaction(x, wc, bc, wf, bf, *, block_b=None):
    """x: (B, C, F); wc: (C, C); bc: (C,); wf: (F, F); bf: (F,)."""
    B, C, F = x.shape
    if block_b is None:
        block_b = B                           # tiny problem: whole batch, 1 grid step
    assert B % block_b == 0
    assert block_b == B or (block_b * C) % 8 == 0, "blocked rows must be 8-aligned"
    nb = B // block_b
    tbc = block_b * C

    # --- one-time wrapper-side layout prep (cheap / free reshapes) ---
    x2 = x.reshape(B * C, F)                                   # (B*C, F)
    wc_blk = jnp.kron(jnp.eye(block_b, dtype=wc.dtype), wc)    # (tbc, tbc) block-diag
    bc_col = jnp.tile(bc.reshape(C, 1), (block_b, 1))          # (tbc, 1)
    wf_t = wf.T                                                # (F, F), hoisted transpose
    bf_row = bf.reshape(1, F)                                  # (1, F)

    out2 = pl.pallas_call(
        _interaction_kernel,
        out_shape=jax.ShapeDtypeStruct((B * C, F), x.dtype),
        grid_spec=pltpu.PrefetchScalarGridSpec(
            num_scalar_prefetch=0,
            grid=(nb,),
            in_specs=[
                pl.BlockSpec((tbc, F), lambda i: (i, 0)),      # x rows for this block
                pl.BlockSpec((tbc, tbc), lambda i: (0, 0)),    # kron(I, Wc)   (resident)
                pl.BlockSpec((tbc, 1), lambda i: (0, 0)),      # bc column     (resident)
                pl.BlockSpec((F, F), lambda i: (0, 0)),        # Wf^T          (resident)
                pl.BlockSpec((1, F), lambda i: (0, 0)),        # bf row        (resident)
            ],
            out_specs=pl.BlockSpec((tbc, F), lambda i: (i, 0)),
        ),
        compiler_params=pltpu.CompilerParams(
            dimension_semantics=("parallel",),
        ),
    )(x2, wc_blk, bc_col, wf_t, bf_row)

    return out2.reshape(B, C, F)


def reference(x, wc, bc, wf, bf):
    # Plain-JAX mirror of the PyTorch forward.
    z = jnp.einsum("cd,bdf->bcf", wc, x) + bc[None, :, None]
    out = jnp.einsum("bcf,gf->bcg", z, wf) + bf[None, None, :]
    return out


if __name__ == "__main__":
    key = jax.random.PRNGKey(0)
    B, C, F = 2, 4, 32  # batch, sensor_channel, filter_num

    k1, k2, k3, k4, k5 = jax.random.split(key, 5)
    x = jax.random.normal(k1, (B, C, F), dtype=jnp.float32)

    # Deterministic parameter init (uniform, roughly matching nn.Linear scale).
    wc = jax.random.uniform(k2, (C, C), jnp.float32, -1.0 / jnp.sqrt(C), 1.0 / jnp.sqrt(C))
    bc = jax.random.uniform(k3, (C,), jnp.float32, -1.0 / jnp.sqrt(C), 1.0 / jnp.sqrt(C))
    wf = jax.random.uniform(k4, (F, F), jnp.float32, -1.0 / jnp.sqrt(F), 1.0 / jnp.sqrt(F))
    bf = jax.random.uniform(k5, (F,), jnp.float32, -1.0 / jnp.sqrt(F), 1.0 / jnp.sqrt(F))

    out = seperate_fc_interaction(x, wc, bc, wf, bf)
    out = jax.block_until_ready(out)

    ref = reference(x, wc, bc, wf, bf)
    assert out.shape == (B, C, F)
    assert jnp.allclose(out, ref, atol=1e-5, rtol=1e-5), "mismatch vs reference"

    print("KERNEL_OK")
</pallas_src>

<mosaic_0001>
module attributes {stable_mosaic.version = 11 : i64} {
  func.func @_interaction_kernel(%arg0: i32, %arg1: memref<8x32xf32, #tpu.memory_space<vmem>>, %arg2: memref<8x8xf32, #tpu.memory_space<vmem>>, %arg3: memref<8x1xf32, #tpu.memory_space<vmem>>, %arg4: memref<32x32xf32, #tpu.memory_space<vmem>>, %arg5: memref<1x32xf32, #tpu.memory_space<vmem>>, %arg6: memref<8x32xf32, #tpu.memory_space<vmem>>) attributes {dimension_semantics = [#tpu.dimension_semantics<parallel>], iteration_bounds = array<i64: 1>, scalar_prefetch = 0 : i64, scratch_operands = 0 : i64, tpu.core_type = #tpu.core_type<tc>, window_params = [{transform_indices = @transform_0, window_bounds = array<i64: 8, 32>}, {pipeline_mode = #tpu.pipeline_mode<synchronous>, transform_indices = @transform_1, window_bounds = array<i64: 8, 8>}, {pipeline_mode = #tpu.pipeline_mode<synchronous>, transform_indices = @transform_2, window_bounds = array<i64: 8, 1>}, {pipeline_mode = #tpu.pipeline_mode<synchronous>, transform_indices = @transform_3, window_bounds = array<i64: 32, 32>}, {pipeline_mode = #tpu.pipeline_mode<synchronous>, transform_indices = @transform_4, window_bounds = array<i64: 1, 32>}, {transform_indices = @transform_5, window_bounds = array<i64: 8, 32>}]} {
    %c0 = arith.constant 0 : index
    %c0_0 = arith.constant 0 : index
    %0 = vector.load %arg1[%c0, %c0_0] : memref<8x32xf32, #tpu.memory_space<vmem>>, vector<8x32xf32>
    %c0_1 = arith.constant 0 : index
    %c0_2 = arith.constant 0 : index
    %1 = vector.load %arg2[%c0_1, %c0_2] : memref<8x8xf32, #tpu.memory_space<vmem>>, vector<8x8xf32>
    %cst = arith.constant dense<0.000000e+00> : vector<8x32xf32>
    %2 = tpu.matmul %1, %0, %cst {dimension_numbers = #tpu.dot_dimension_numbers<[1], [0], [0], [1], [0, 0, 1, 1], [], []>} : vector<8x8xf32>, vector<8x32xf32>, vector<8x32xf32> -> vector<8x32xf32>
    %c0_3 = arith.constant 0 : index
    %c0_4 = arith.constant 0 : index
    %3 = vector.load %arg3[%c0_3, %c0_4] : memref<8x1xf32, #tpu.memory_space<vmem>>, vector<8x1xf32>
    %4 = vector.broadcast %3 : vector<8x1xf32> to vector<8x32xf32>
    %5 = arith.addf %2, %4 : vector<8x32xf32>
    %c0_5 = arith.constant 0 : index
    %c0_6 = arith.constant 0 : index
    %6 = vector.load %arg4[%c0_5, %c0_6] : memref<32x32xf32, #tpu.memory_space<vmem>>, vector<32x32xf32>
    %cst_7 = arith.constant dense<0.000000e+00> : vector<8x32xf32>
    %7 = tpu.matmul %5, %6, %cst_7 {dimension_numbers = #tpu.dot_dimension_numbers<[1], [0], [0], [1], [0, 0, 1, 1], [], []>} : vector<8x32xf32>, vector<32x32xf32>, vector<8x32xf32> -> vector<8x32xf32>
    %c0_8 = arith.constant 0 : index
    %c0_9 = arith.constant 0 : index
    %8 = vector.load %arg5[%c0_8, %c0_9] : memref<1x32xf32, #tpu.memory_space<vmem>>, vector<1x32xf32>
    %9 = vector.broadcast %8 : vector<1x32xf32> to vector<8x32xf32>
    %10 = arith.addf %7, %9 : vector<8x32xf32>
    %c0_10 = arith.constant 0 : index
    %c0_11 = arith.constant 0 : index
    %11 = vector.load %arg6[%c0_10, %c0_11] : memref<8x32xf32, #tpu.memory_space<vmem>>, vector<8x32xf32>
    tpu.vector_store %arg6[%c0_10, %c0_11], %10 {strides = array<i32>} : memref<8x32xf32, #tpu.memory_space<vmem>>, vector<8x32xf32>,
    return
  }
  func.func @transform_0(%arg0: i32) -> (i32, i32) {
    %c0_i32 = arith.constant 0 : i32
    %c0_i32_0 = arith.constant 0 : i32
    return %arg0, %c0_i32 : i32, i32
  }
  func.func @transform_1(%arg0: i32) -> (i32, i32) {
    %c0_i32 = arith.constant 0 : i32
    %c0_i32_0 = arith.constant 0 : i32
    %c0_i32_1 = arith.constant 0 : i32
    return %c0_i32, %c0_i32_0 : i32, i32
  }
  func.func @transform_2(%arg0: i32) -> (i32, i32) {
    %c0_i32 = arith.constant 0 : i32
    %c0_i32_0 = arith.constant 0 : i32
    %c0_i32_1 = arith.constant 0 : i32
    return %c0_i32, %c0_i32_0 : i32, i32
  }
  func.func @transform_3(%arg0: i32) -> (i32, i32) {
    %c0_i32 = arith.constant 0 : i32
    %c0_i32_0 = arith.constant 0 : i32
    %c0_i32_1 = arith.constant 0 : i32
    return %c0_i32, %c0_i32_0 : i32, i32
  }
  func.func @transform_4(%arg0: i32) -> (i32, i32) {
    %c0_i32 = arith.constant 0 : i32
    %c0_i32_0 = arith.constant 0 : i32
    %c0_i32_1 = arith.constant 0 : i32
    return %c0_i32, %c0_i32_0 : i32, i32
  }
  func.func @transform_5(%arg0: i32) -> (i32, i32) {
    %c0_i32 = arith.constant 0 : i32
    %c0_i32_0 = arith.constant 0 : i32
    return %arg0, %c0_i32 : i32, i32
  }
}

</mosaic_0001>

<llo_original>
// kernel: tpu_custom_call.1
$region0: #{tpu_custom_call.1}
  #allocation0 [shape = 'u32[]', space=smem, size = 0x4, offset = 0x4, fixed_abs, tag = 'smem constant byte address 0x4 - core index']
  #allocation1 [shape = 'u32[72,128]{1,0:T(1,128)}', space=vmem, size = 0x9000, scoped, tag = 'internal scratch']
  %s0 = inlined_call_operand.vmem [shape: f32[8,32], index: 0, kind: input, shape index: {}]
  %s1 = inlined_call_operand.hbm [shape: f32[8,8], index: 1, kind: input, shape index: {}]
  %s2 = inlined_call_operand.vmem [shape: f32[8,1], index: 2, kind: input, shape index: {}]
  %s3 = inlined_call_operand.hbm [shape: f32[32,32], index: 3, kind: input, shape index: {}]
  %s4 = inlined_call_operand.vmem [shape: f32[1,32], index: 4, kind: input, shape index: {}]
  %s5 = inlined_call_operand.hbm [shape: f32[8,32], index: 5, kind: output, shape index: {}]
  %s6 = sld [smem:[#allocation0]]
  $region38: #{tpu_custom_call.1} parent=0
    _
  %s8 = ssub.s32 1, %s6
  %s9 = scalar_select 0, %s8, %s6
  $region1: #{tpu_custom_call.1} parent=0
    #allocation2 [shape = 'u8[4096]{0}', space=vmem, size = 0x1000, scoped, tag = 'input window, operand 1, single buffered']
    #allocation3 [shape = 's32[1]{0}', space=sflag, size = 0x4, scoped, tag = 'scoped memory for tpu_custom_call.1']
    #allocation4 [shape = 's32[1]{0}', space=sflag, size = 0x4, scoped, tag = 'scoped memory for tpu_custom_call.1']
    #allocation5 [shape = 'u8[16384]{0}', space=vmem, size = 0x4000, scoped, tag = 'input window, operand 3, single buffered']
    #allocation6 [shape = 's32[1]{0}', space=sflag, size = 0x4, scoped, tag = 'scoped memory for tpu_custom_call.1']
    #allocation7 [shape = 'u8[4096]{0}', space=vmem, size = 0x1000, scoped, tag = 'output window, operand 0, single buffered']
    %10 = vsyncpa [#allocation3], 0
    %11 = vsyncpa [#allocation6], 0
    %12 = vsyncpa [#allocation4], 0
    // Predicated region
    $region2: #{tpu_custom_call.1} parent=1 // pred_check
      _
    $region3: #{tpu_custom_call.1} parent=1 // pred_check_branch
      %14 = sbr.rel (0) target = $region5
    $region4: #{tpu_custom_call.1} parent=1 // pred_region
      _
    $region5: #{tpu_custom_call.1} parent=1 // pred_fallthru
      _
    // Predicated region
    $region6: #{tpu_custom_call.1} parent=1 // pred_check
      _
    $region7: #{tpu_custom_call.1} parent=1 // pred_check_branch
      %16 = sbr.rel (0) target = $region9
    $region8: #{tpu_custom_call.1} parent=1 // pred_region
      %18 = vsyncadd [#allocation3], 0
      %s20 = sshll.u32 %s1, 4
      %s21 = int_to_ptr.hbm [resolvable:$true] %s20
      %s22 = sshll.u32 [#allocation2], 4
      %s23 = int_to_ptr.vmem [resolvable:$true] %s22
      %25 = dma.hbm_to_vmem [thread:$0]  %s21, 128, %s23, [#allocation3]
    $region9: #{tpu_custom_call.1} parent=1 // pred_fallthru
      _
    // Predicated region
    $region10: #{tpu_custom_call.1} parent=1 // pred_check
      _
    $region11: #{tpu_custom_call.1} parent=1 // pred_check_branch
      %27 = sbr.rel (0) target = $region13
    $region12: #{tpu_custom_call.1} parent=1 // pred_region
      _
    $region13: #{tpu_custom_call.1} parent=1 // pred_fallthru
      _
    // Predicated region
    $region14: #{tpu_custom_call.1} parent=1 // pred_check
      _
    $region15: #{tpu_custom_call.1} parent=1 // pred_check_branch
      %29 = sbr.rel (0) target = $region17
    $region16: #{tpu_custom_call.1} parent=1 // pred_region
      %31 = vsyncadd [#allocation6], 0
      %s32 = sshll.u32 %s3, 4
      %s33 = int_to_ptr.hbm [resolvable:$true] %s32
      %s34 = sshll.u32 [#allocation5], 4
      %s35 = int_to_ptr.vmem [resolvable:$true] %s34
      %40 = dma.hbm_to_vmem [thread:$0]  %s33, 512, %s35, [#allocation6], 128, 128, 8
    $region17: #{tpu_custom_call.1} parent=1 // pred_fallthru
      _
    // Predicated region
    $region18: #{tpu_custom_call.1} parent=1 // pred_check
      _
    $region19: #{tpu_custom_call.1} parent=1 // pred_check_branch
      %42 = sbr.rel (0) target = $region21
    $region20: #{tpu_custom_call.1} parent=1 // pred_region
      _
    $region21: #{tpu_custom_call.1} parent=1 // pred_fallthru
      _
    // Predicated region
    $region22: #{tpu_custom_call.1} parent=1 // pred_check
      _
    $region23: #{tpu_custom_call.1} parent=1 // pred_check_branch
      %44 = sbr.rel (0) target = $region25
    $region24: #{tpu_custom_call.1} parent=1 // pred_region
      %46 = dma.done [#allocation3], 128
    $region25: #{tpu_custom_call.1} parent=1 // pred_fallthru
      _
    // Predicated region
    $region26: #{tpu_custom_call.1} parent=1 // pred_check
      _
    $region27: #{tpu_custom_call.1} parent=1 // pred_check_branch
      %48 = sbr.rel (0) target = $region29
    $region28: #{tpu_custom_call.1} parent=1 // pred_region
      %50 = dma.done [#allocation6], 512
    $region29: #{tpu_custom_call.1} parent=1 // pred_fallthru
      _
    %v51 = vld [vmem:[%s0] sm:$0xff]
    %v52 = vld [vmem:[#allocation2] sm:$0xff]
    %v53 = vld [vmem:[%s2] sm:$0xff]
    %55 = vset.pattern.permute.xlu0 0
    %56 = vperm.xlu0 %55, %v53
    %v57 = vpop.permute.xlu0 %56
    %vm59 = vcmask 64512
    %v61 = vsel %vm59, %v52, 0
    %63 = vmatpush.msra.mxu0 0.0
    %64 = vmatpush.msra.mxu0 0.0
    %65 = vmatpush.msra.mxu0 0.0
    %66 = vmatpush.msra.mxu0 0.0
    %67 = vmatpush.msra.mxu0 0.0
    %68 = vmatpush.msra.mxu0 0.0
    %69 = vmatpush.msra.mxu0 0.0
    %70 = vmatpush.msra.mxu0 0.0
    %71 = vmatpush.msra.mxu0 0.0
    %72 = vmatpush.msra.mxu0 0.0
    %73 = vmatpush.msra.mxu0 0.0
    %74 = vmatpush.msra.mxu0 0.0
    %75 = vmatpush.msra.mxu0 0.0
    %76 = vmatpush.msra.mxu0 0.0
    %77 = vmatpush.msra.mxu0 0.0
    %78 = vmatpush.msra.mxu0 %v51
    %79 = vmatmul.f32.gmra.mxu0 %v61
    %v80 = vpop.f32.mrf.mxu0
    %v81 = vadd.f32 %v57, %v80
    %82 = vdwg.mxu0
    %v83 = vld [vmem:[#allocation5] sm:$0xff]
    %v84 = vld [vmem:[#allocation5 + $0x8] sm:$0xff]
    %v85 = vld [vmem:[#allocation5 + $0x10] sm:$0xff]
    %v86 = vld [vmem:[#allocation5 + $0x18] sm:$0xff]
    %v87 = vld [vmem:[%s4] sm:$0x1]
    %v89 = vperm.slane %v87, 0
    %vm91 = vcmask 261120
    %v93 = vsel %vm91, %v81, 0
    %95 = vmatpush.msra.mxu0 0.0
    %96 = vmatpush.msra.mxu0 0.0
    %97 = vmatpush.msra.mxu0 0.0
    %98 = vmatpush.msra.mxu0 0.0
    %99 = vmatpush.msra.mxu0 0.0
    %100 = vmatpush.msra.mxu0 0.0
    %101 = vmatpush.msra.mxu0 0.0
    %102 = vmatpush.msra.mxu0 0.0
    %103 = vmatpush.msra.mxu0 0.0
    %104 = vmatpush.msra.mxu0 0.0
    %105 = vmatpush.msra.mxu0 0.0
    %106 = vmatpush.msra.mxu0 0.0
    %107 = vmatpush.msra.mxu0 %v86
    %108 = vmatpush.msra.mxu0 %v85
    %109 = vmatpush.msra.mxu0 %v84
    %110 = vmatpush.msra.mxu0 %v83
    %111 = vmatmul.f32.gmra.mxu0 %v93
    %v112 = vpop.f32.mrf.mxu0
    %v113 = vadd.f32 %v89, %v112
    %114 = vdwg.mxu0
    %115 = vst.msk [vmem:[#allocation7] sm:$0xff] %vm91, %v113
    // Predicated region
    $region30: #{tpu_custom_call.1} parent=1 // pred_check
      _
    $region31: #{tpu_custom_call.1} parent=1 // pred_check_branch
      %117 = sbr.rel (0) target = $region33
    $region32: #{tpu_custom_call.1} parent=1 // pred_region
      %119 = vsyncadd [#allocation4], 0
      %s121 = sshll.u32 [#allocation7], 4
      %s122 = int_to_ptr.vmem [resolvable:$true] %s121
      %s123 = sshll.u32 %s5, 4
      %s124 = int_to_ptr.hbm [resolvable:$true] %s123
      %126 = dma.vmem_to_hbm [thread:$0]  %s122, 128, %s124, [#allocation4]
    $region33: #{tpu_custom_call.1} parent=1 // pred_fallthru
      _
    // Predicated region
    $region34: #{tpu_custom_call.1} parent=1 // pred_check
      _
    $region35: #{tpu_custom_call.1} parent=1 // pred_check_branch
      %128 = sbr.rel (0) target = $region37
    $region36: #{tpu_custom_call.1} parent=1 // pred_region
      %130 = dma.done [#allocation4], 128
    $region37: #{tpu_custom_call.1} parent=1 // pred_fallthru
      _
    %131 = vsyncpa [#allocation3], 1
    %132 = vsyncpa [#allocation6], 1
    %133 = vsyncpa [#allocation4], 1

</llo_original>
